<compile_context>
chip_gen: v6e
topology: v6e:2x2x1
jax: 0.10.0
libtpu: 0.0.40
codegen_flags: <defaults>
</compile_context>

<pallas_src>
import functools
import math

import numpy as np
import jax
import jax.numpy as jnp
from jax.experimental import pallas as pl
from jax.experimental.pallas import tpu as pltpu


def _round_up(x, m):
    return ((x + m - 1) // m) * m


def _gcc_phat_kernel(sig_ref, wf_ref, wi_ref, out_ref, *, pairs, block_b,
                     tile_k, eps2):
    """One (batch-block, frequency-tile) grid step.

    sig_ref : [1, n_mics*block_b, n_samples]   bf16, mic-major rows
    wf_ref  : [1, n_samples, 2*tile_k]         bf16, fused [cos | -sin]
    wi_ref  : [1, 2*tile_k, gcc_pad]           bf16, stacked [w_re ; w_im],
                                               Hermitian fold / zero-pad /
                                               real part / fftshift / lag
                                               window / 1/N all baked in
    out_ref : [1, n_pairs*block_b, gcc_pad]    f32, accumulated over k tiles
    """
    kt = pl.program_id(1)

    @pl.when(kt == 0)
    def _init():
        out_ref[...] = jnp.zeros_like(out_ref)

    # Forward half-spectrum rDFT for this frequency tile: one fused bf16 MXU
    # matmul producing [Re | Im] along lanes, f32 accumulation.
    spec = jnp.dot(sig_ref[0], wf_ref[0], preferred_element_type=jnp.float32)
    re = spec[:, :tile_k]
    im = spec[:, tile_k:]

    # Static mic-pair gather: rows are mic-major, so each mic is a contiguous
    # block of block_b rows (aligned slices when block_b % 8 == 0).
    def rows(t, m):
        return t[m * block_b:(m + 1) * block_b, :]

    re_i = jnp.concatenate([rows(re, a) for a, _ in pairs], axis=0)
    im_i = jnp.concatenate([rows(im, a) for a, _ in pairs], axis=0)
    re_j = jnp.concatenate([rows(re, b) for _, b in pairs], axis=0)
    im_j = jnp.concatenate([rows(im, b) for _, b in pairs], axis=0)

    # Cross-power spectrum R = SIG_i * conj(SIG_j) + PHAT weighting.
    # Single EUP pass: 1/sqrt(|R|^2 + eps^2).
    r_re = re_i * re_j + im_i * im_j
    r_im = im_i * re_j - re_i * im_j
    inv_mag = jax.lax.rsqrt(r_re * r_re + r_im * r_im + eps2)
    p = jnp.concatenate([r_re * inv_mag, r_im * inv_mag],
                        axis=-1).astype(jnp.bfloat16)

    # Partial inverse rDFT over this frequency tile: a single fused matmul
    # (K = 2*tile_k) accumulated directly into the resident f32 output block.
    out_ref[0] += jnp.dot(p, wi_ref[0], preferred_element_type=jnp.float32)


class GCCPHATFeaturesPallas:
    def __init__(self, n_mics, fs=16000, n_samples_in_frame=4096,
                 max_tau=0.001, interp_factor=4, eps=1e-8,
                 freq_tile=384, mxu_rows=512):
        # freq_tile: target frequency-tile width (bins/step); snapped down to a
        #            multiple of 128 that exactly divides the padded bin count.
        #            Tuning: ~256-384 on v7x / v5e, 384-512 on v6e.
        # mxu_rows:  target M rows of the forward matmul per step.
        #            Tuning: ~256 (v5e), ~512 (v7x), 768-1024 (v6e, with the
        #            raised VMEM limit).
        self.n_mics = n_mics
        self.fs = fs
        self.n_samples = n_samples_in_frame
        self.max_tau = max_tau
        self.interp_factor = interp_factor
        self.eps = float(eps)
        self.mxu_rows = int(mxu_rows)
        self.n_fft = 2 * self.n_samples
        self.n_fft_upsampled = self.n_fft * self.interp_factor
        self.max_shift_samples = math.ceil(max_tau * fs * interp_factor)
        self.gcc_feature_length = 2 * self.max_shift_samples + 1

        pairs = [(i, j) for i in range(n_mics) for j in range(i + 1, n_mics)]
        self.pairs = np.asarray(pairs, dtype=np.int32)
        self.pairs_static = tuple((int(i), int(j)) for i, j in pairs)
        self.n_pairs = len(pairs)

        # Padded / tiled geometry.  Lag axis padded to a lane-dense multiple
        # of 128; tile_k chosen as a multiple of 128 dividing nb_pad exactly
        # so no dead frequency tile is ever streamed or multiplied.
        self.gcc_pad = _round_up(self.gcc_feature_length, 128)
        nb = self.n_fft // 2 + 1                       # Hermitian-unique bins
        self.nb_pad = _round_up(nb, 128)
        units = self.nb_pad // 128
        target = max(1, min(int(freq_tile) // 128, units))
        d = max(u for u in range(1, target + 1) if units % u == 0)
        self.tile_k = 128 * d
        self.n_kt = self.nb_pad // self.tile_k

        # ---- Forward rDFT table, fused [cos | -sin], tiled along bins ----
        n_idx = np.arange(self.n_samples, dtype=np.float64)[:, None]
        k_idx = np.arange(self.nb_pad, dtype=np.float64)[None, :]
        ang_f = 2.0 * np.pi * n_idx * k_idx / self.n_fft
        cos_f = np.cos(ang_f)
        msin_f = -np.sin(ang_f)
        w_fwd = np.zeros((self.n_kt, self.n_samples, 2 * self.tile_k),
                         np.float32)
        for t in range(self.n_kt):
            sl = slice(t * self.tile_k, (t + 1) * self.tile_k)
            w_fwd[t, :, :self.tile_k] = cos_f[:, sl]
            w_fwd[t, :, self.tile_k:] = msin_f[:, sl]

        # ---- Inverse table: Hermitian-folded inverse DFT fused with
        # zero-padding to n_fft_upsampled, real part, fftshift, the center lag
        # window and the 1/n_fft_upsampled scale.  Padded bins get zero
        # weight.  Re and Im weights are stacked along rows per tile so the
        # inverse transform is one matmul with K = 2*tile_k. ----
        h = self.n_fft // 2
        lag = ((np.arange(self.gcc_pad) - self.max_shift_samples)
               % self.n_fft_upsampled).astype(np.float64)[None, :]
        k_full = np.arange(self.n_fft, dtype=np.float64)[:, None]
        ang_i = 2.0 * np.pi * k_full * lag / self.n_fft_upsampled
        cos_i = np.cos(ang_i)
        sin_i = np.sin(ang_i)
        w_re = np.zeros((self.nb_pad, self.gcc_pad), np.float64)
        w_im = np.zeros((self.nb_pad, self.gcc_pad), np.float64)
        w_re[0] = cos_i[0]
        w_im[0] = -sin_i[0]
        w_re[h] = cos_i[h]
        w_im[h] = -sin_i[h]
        if h > 1:
            w_re[1:h] = cos_i[1:h] + cos_i[self.n_fft - 1:h:-1]
            w_im[1:h] = -sin_i[1:h] + sin_i[self.n_fft - 1:h:-1]
        inv_n_up = 1.0 / float(self.n_fft_upsampled)
        w_re *= inv_n_up
        w_im *= inv_n_up
        w_inv = np.zeros((self.n_kt, 2 * self.tile_k, self.gcc_pad),
                         np.float32)
        for t in range(self.n_kt):
            sl = slice(t * self.tile_k, (t + 1) * self.tile_k)
            w_inv[t, :self.tile_k, :] = w_re[sl]
            w_inv[t, self.tile_k:, :] = w_im[sl]

        self.w_fwd = jnp.asarray(w_fwd, dtype=jnp.bfloat16)
        self.w_inv = jnp.asarray(w_inv, dtype=jnp.bfloat16)

    def _pick_block_b(self, batch):
        # Target ~mxu_rows forward-matmul rows per step.  For batches larger
        # than one block keep block_b a multiple of 8 (sublane-aligned pair
        # gather) and guarantee >= 2 batch blocks so the "parallel" batch axis
        # can shard across both TensorCores on v7x.  Awkward batch sizes are
        # handled by zero-padding the batch (never "whole batch in one block").
        cap = max(1, self.mxu_rows // max(self.n_mics, 1))
        if batch <= cap:
            return batch
        return (cap // 8) * 8 if cap >= 8 else cap

    def __call__(self, signals):
        if (signals.ndim != 3 or signals.shape[1] != self.n_mics
                or signals.shape[2] != self.n_samples):
            raise ValueError(
                f"Input signal shape mismatch. Expected "
                f"[*, {self.n_mics}, {self.n_samples}], got {tuple(signals.shape)}")
        batch = signals.shape[0]
        block_b = self._pick_block_b(batch)
        n_bblocks = -(-batch // block_b)
        padded_batch = n_bblocks * block_b

        # Wrapper-side layout plumbing: cast to bf16 once, pad the batch to a
        # whole number of blocks, then fold mic-major per block so the
        # kernel's pair gather is contiguous rows (row = mic*block_b + b).
        sig = jnp.asarray(signals, jnp.float32).astype(jnp.bfloat16)
        if padded_batch != batch:
            sig = jnp.pad(sig, ((0, padded_batch - batch), (0, 0), (0, 0)))
        sig = sig.reshape(n_bblocks, block_b, self.n_mics, self.n_samples)
        sig = jnp.transpose(sig, (0, 2, 1, 3)).reshape(
            n_bblocks, self.n_mics * block_b, self.n_samples)

        kernel = functools.partial(
            _gcc_phat_kernel, pairs=self.pairs_static, block_b=block_b,
            tile_k=self.tile_k, eps2=self.eps * self.eps)

        # Explicit scoped-VMEM limit from the double-buffered step footprint.
        step_vmem = 2 * (self.n_mics * block_b * self.n_samples * 2
                         + self.n_samples * 2 * self.tile_k * 2
                         + 2 * self.tile_k * self.gcc_pad * 2
                         + self.n_pairs * block_b * self.gcc_pad * 4)
        vmem_limit = int(min(max(32 << 20, step_vmem + (8 << 20)), 96 << 20))

        out3 = pl.pallas_call(
            kernel,
            out_shape=jax.ShapeDtypeStruct(
                (n_bblocks, self.n_pairs * block_b, self.gcc_pad),
                jnp.float32),
            grid=(n_bblocks, self.n_kt),
            in_specs=[
                pl.BlockSpec((1, self.n_mics * block_b, self.n_samples),
                             lambda b, k: (b, 0, 0)),
                pl.BlockSpec((1, self.n_samples, 2 * self.tile_k),
                             lambda b, k: (k, 0, 0)),
                pl.BlockSpec((1, 2 * self.tile_k, self.gcc_pad),
                             lambda b, k: (k, 0, 0)),
            ],
            out_specs=pl.BlockSpec((1, self.n_pairs * block_b, self.gcc_pad),
                                   lambda b, k: (b, 0, 0)),
            compiler_params=pltpu.CompilerParams(
                dimension_semantics=("parallel", "arbitrary"),
                vmem_limit_bytes=vmem_limit),
        )(sig, self.w_fwd, self.w_inv)

        # Undo the pair-major, block-folded layout and crop padding.
        out = out3.reshape(n_bblocks, self.n_pairs, block_b, self.gcc_pad)
        out = jnp.transpose(out, (0, 2, 1, 3)).reshape(
            padded_batch, self.n_pairs, self.gcc_pad)
        return out[:batch, :, :self.gcc_feature_length]


def gcc_phat_reference(signals, mod):
    """Pure-JAX mirror of the PyTorch forward (uses jnp.fft)."""
    SIG = jnp.fft.fft(signals, n=mod.n_fft, axis=-1)
    sig_i = SIG[:, mod.pairs[:, 0], :]
    sig_j = SIG[:, mod.pairs[:, 1], :]
    R = sig_i * jnp.conj(sig_j)
    R_phat = R / (jnp.abs(R) + mod.eps)
    cc = jnp.fft.ifft(R_phat, n=mod.n_fft_upsampled, axis=-1).real
    cc = jnp.fft.fftshift(cc, axes=-1)
    mid = cc.shape[-1] // 2
    start = mid - mod.max_shift_samples
    end = mid + mod.max_shift_samples + 1
    return cc[:, :, start:end]


if __name__ == "__main__":
    key = jax.random.PRNGKey(0)

    # Test 1: n_mics=4 -> n_pairs=6, n_samples=128 -> n_fft=256, n_fft_up=1024,
    # max_shift = ceil(0.001*16000*4) = 64 -> gcc_feature_length = 129.
    # freq_tile=128 forces 2 frequency tiles so the reduction path is tested.
    batch, n_mics, n_samples = 2, 4, 128
    mod = GCCPHATFeaturesPallas(
        n_mics=n_mics, fs=16000, n_samples_in_frame=n_samples,
        max_tau=0.001, interp_factor=4, eps=1e-8, freq_tile=128)
    key, sub = jax.random.split(key)
    signals = jax.random.normal(sub, (batch, n_mics, n_samples),
                                dtype=jnp.float32)
    out = jax.block_until_ready(mod(signals))
    assert out.shape == (batch, mod.n_pairs, mod.gcc_feature_length), out.shape
    ref = jax.block_until_ready(gcc_phat_reference(signals, mod))
    max_err = float(jnp.max(jnp.abs(out - ref)))
    assert max_err < 5e-3, f"test1 max abs error too large: {max_err}"

    # Test 2: batch padding + multi-block grid (n_bblocks=3, block_b=2) and a
    # different mic count; freq_tile=128 -> 3 frequency tiles.
    batch2, n_mics2, n_samples2 = 5, 3, 256
    mod2 = GCCPHATFeaturesPallas(
        n_mics=n_mics2, fs=16000, n_samples_in_frame=n_samples2,
        max_tau=0.001, interp_factor=4, eps=1e-8, freq_tile=128, mxu_rows=8)
    key, sub = jax.random.split(key)
    signals2 = jax.random.normal(sub, (batch2, n_mics2, n_samples2),
                                 dtype=jnp.float32)
    out2 = jax.block_until_ready(mod2(signals2))
    assert out2.shape == (batch2, mod2.n_pairs, mod2.gcc_feature_length), out2.shape
    ref2 = jax.block_until_ready(gcc_phat_reference(signals2, mod2))
    max_err2 = float(jnp.max(jnp.abs(out2 - ref2)))
    assert max_err2 < 5e-3, f"test2 max abs error too large: {max_err2}"

    print("KERNEL_OK")
</pallas_src>

<mosaic_0001>
module attributes {stable_mosaic.version = 11 : i64} {
  func.func @_gcc_phat_kernel(%arg0: i32, %arg1: i32, %arg2: memref<1x8x128xbf16, #tpu.memory_space<vmem>>, %arg3: memref<1x128x256xbf16, #tpu.memory_space<vmem>>, %arg4: memref<1x256x256xbf16, #tpu.memory_space<vmem>>, %arg5: memref<1x12x256xf32, #tpu.memory_space<vmem>>) attributes {dimension_semantics = [#tpu.dimension_semantics<parallel>, #tpu.dimension_semantics<arbitrary>], iteration_bounds = array<i64: 1, 2>, scalar_prefetch = 0 : i64, scratch_operands = 0 : i64, tpu.core_type = #tpu.core_type<tc>, window_params = [{transform_indices = @transform_0, window_bounds = array<i64: 1, 8, 128>}, {transform_indices = @transform_1, window_bounds = array<i64: 1, 128, 256>}, {transform_indices = @transform_2, window_bounds = array<i64: 1, 256, 256>}, {transform_indices = @transform_3, window_bounds = array<i64: 1, 12, 256>}]} {
    %c0_i32 = arith.constant 0 : i32
    %0 = arith.cmpi eq, %arg1, %c0_i32 : i32
    %1 = arith.extui %0 : i1 to i32
    %c0_i32_0 = arith.constant 0 : i32
    %2 = arith.cmpi ne, %1, %c0_i32_0 : i32
    scf.if %2 {
      %cst_17 = arith.constant 0.000000e+00 : f32
      %63 = vector.broadcast %cst_17 : f32 to vector<1x12x256xf32>
      %c0_18 = arith.constant 0 : index
      %c0_19 = arith.constant 0 : index
      %c0_20 = arith.constant 0 : index
      %64 = vector.load %arg5[%c0_18, %c0_19, %c0_20] : memref<1x12x256xf32, #tpu.memory_space<vmem>>, vector<1x12x256xf32>
      tpu.vector_store %arg5[%c0_18, %c0_19, %c0_20], %63 {strides = array<i32>} : memref<1x12x256xf32, #tpu.memory_space<vmem>>, vector<1x12x256xf32>,
    } else {
    }
    %c0 = arith.constant 0 : index
    %c0_1 = arith.constant 0 : index
    %c0_2 = arith.constant 0 : index
    %3 = vector.load %arg2[%c0, %c0_1, %c0_2] : memref<1x8x128xbf16, #tpu.memory_space<vmem>>, vector<1x8x128xbf16>
    %4 = vector.shape_cast %3 : vector<1x8x128xbf16> to vector<8x128xbf16>
    %c0_3 = arith.constant 0 : index
    %c0_4 = arith.constant 0 : index
    %c0_5 = arith.constant 0 : index
    %5 = vector.load %arg3[%c0_3, %c0_4, %c0_5] : memref<1x128x256xbf16, #tpu.memory_space<vmem>>, vector<1x128x256xbf16>
    %6 = vector.shape_cast %5 : vector<1x128x256xbf16> to vector<128x256xbf16>
    %cst = arith.constant dense<0.000000e+00> : vector<8x256xf32>
    %7 = tpu.matmul %4, %6, %cst {dimension_numbers = #tpu.dot_dimension_numbers<[1], [0], [0], [1], [0, 0, 1, 1], [], []>} : vector<8x128xbf16>, vector<128x256xbf16>, vector<8x256xf32> -> vector<8x256xf32>
    %8 = vector.extract_strided_slice %7 {offsets = [0, 0], sizes = [8, 128], strides = [1, 1]} : vector<8x256xf32> to vector<8x128xf32>
    %9 = vector.extract_strided_slice %7 {offsets = [0, 128], sizes = [8, 128], strides = [1, 1]} : vector<8x256xf32> to vector<8x128xf32>
    %10 = vector.extract_strided_slice %8 {offsets = [0, 0], sizes = [2, 128], strides = [1, 1]} : vector<8x128xf32> to vector<2x128xf32>
    %11 = vector.extract_strided_slice %8 {offsets = [0, 0], sizes = [2, 128], strides = [1, 1]} : vector<8x128xf32> to vector<2x128xf32>
    %12 = vector.extract_strided_slice %8 {offsets = [0, 0], sizes = [2, 128], strides = [1, 1]} : vector<8x128xf32> to vector<2x128xf32>
    %13 = vector.extract_strided_slice %8 {offsets = [2, 0], sizes = [2, 128], strides = [1, 1]} : vector<8x128xf32> to vector<2x128xf32>
    %14 = vector.extract_strided_slice %8 {offsets = [2, 0], sizes = [2, 128], strides = [1, 1]} : vector<8x128xf32> to vector<2x128xf32>
    %15 = vector.extract_strided_slice %8 {offsets = [4, 0], sizes = [2, 128], strides = [1, 1]} : vector<8x128xf32> to vector<2x128xf32>
    %16 = tpu.concatenate %10, %11, %12, %13, %14, %15 in 0 : vector<2x128xf32>, vector<2x128xf32>, vector<2x128xf32>, vector<2x128xf32>, vector<2x128xf32>, vector<2x128xf32> -> vector<12x128xf32>
    %17 = vector.extract_strided_slice %9 {offsets = [0, 0], sizes = [2, 128], strides = [1, 1]} : vector<8x128xf32> to vector<2x128xf32>
    %18 = vector.extract_strided_slice %9 {offsets = [0, 0], sizes = [2, 128], strides = [1, 1]} : vector<8x128xf32> to vector<2x128xf32>
    %19 = vector.extract_strided_slice %9 {offsets = [0, 0], sizes = [2, 128], strides = [1, 1]} : vector<8x128xf32> to vector<2x128xf32>
    %20 = vector.extract_strided_slice %9 {offsets = [2, 0], sizes = [2, 128], strides = [1, 1]} : vector<8x128xf32> to vector<2x128xf32>
    %21 = vector.extract_strided_slice %9 {offsets = [2, 0], sizes = [2, 128], strides = [1, 1]} : vector<8x128xf32> to vector<2x128xf32>
    %22 = vector.extract_strided_slice %9 {offsets = [4, 0], sizes = [2, 128], strides = [1, 1]} : vector<8x128xf32> to vector<2x128xf32>
    %23 = tpu.concatenate %17, %18, %19, %20, %21, %22 in 0 : vector<2x128xf32>, vector<2x128xf32>, vector<2x128xf32>, vector<2x128xf32>, vector<2x128xf32>, vector<2x128xf32> -> vector<12x128xf32>
    %24 = vector.extract_strided_slice %8 {offsets = [2, 0], sizes = [2, 128], strides = [1, 1]} : vector<8x128xf32> to vector<2x128xf32>
    %25 = vector.extract_strided_slice %8 {offsets = [4, 0], sizes = [2, 128], strides = [1, 1]} : vector<8x128xf32> to vector<2x128xf32>
    %26 = vector.extract_strided_slice %8 {offsets = [6, 0], sizes = [2, 128], strides = [1, 1]} : vector<8x128xf32> to vector<2x128xf32>
    %27 = vector.extract_strided_slice %8 {offsets = [4, 0], sizes = [2, 128], strides = [1, 1]} : vector<8x128xf32> to vector<2x128xf32>
    %28 = vector.extract_strided_slice %8 {offsets = [6, 0], sizes = [2, 128], strides = [1, 1]} : vector<8x128xf32> to vector<2x128xf32>
    %29 = vector.extract_strided_slice %8 {offsets = [6, 0], sizes = [2, 128], strides = [1, 1]} : vector<8x128xf32> to vector<2x128xf32>
    %30 = tpu.concatenate %24, %25, %26, %27, %28, %29 in 0 : vector<2x128xf32>, vector<2x128xf32>, vector<2x128xf32>, vector<2x128xf32>, vector<2x128xf32>, vector<2x128xf32> -> vector<12x128xf32>
    %31 = vector.extract_strided_slice %9 {offsets = [2, 0], sizes = [2, 128], strides = [1, 1]} : vector<8x128xf32> to vector<2x128xf32>
    %32 = vector.extract_strided_slice %9 {offsets = [4, 0], sizes = [2, 128], strides = [1, 1]} : vector<8x128xf32> to vector<2x128xf32>
    %33 = vector.extract_strided_slice %9 {offsets = [6, 0], sizes = [2, 128], strides = [1, 1]} : vector<8x128xf32> to vector<2x128xf32>
    %34 = vector.extract_strided_slice %9 {offsets = [4, 0], sizes = [2, 128], strides = [1, 1]} : vector<8x128xf32> to vector<2x128xf32>
    %35 = vector.extract_strided_slice %9 {offsets = [6, 0], sizes = [2, 128], strides = [1, 1]} : vector<8x128xf32> to vector<2x128xf32>
    %36 = vector.extract_strided_slice %9 {offsets = [6, 0], sizes = [2, 128], strides = [1, 1]} : vector<8x128xf32> to vector<2x128xf32>
    %37 = tpu.concatenate %31, %32, %33, %34, %35, %36 in 0 : vector<2x128xf32>, vector<2x128xf32>, vector<2x128xf32>, vector<2x128xf32>, vector<2x128xf32>, vector<2x128xf32> -> vector<12x128xf32>
    %38 = arith.mulf %16, %30 : vector<12x128xf32>
    %39 = arith.mulf %23, %37 : vector<12x128xf32>
    %40 = arith.addf %38, %39 : vector<12x128xf32>
    %41 = arith.mulf %23, %30 : vector<12x128xf32>
    %42 = arith.mulf %16, %37 : vector<12x128xf32>
    %43 = arith.subf %41, %42 : vector<12x128xf32>
    %44 = arith.mulf %40, %40 : vector<12x128xf32>
    %45 = arith.mulf %43, %43 : vector<12x128xf32>
    %46 = arith.addf %44, %45 : vector<12x128xf32>
    %cst_6 = arith.constant 1.000000e-16 : f32
    %47 = vector.broadcast %cst_6 : f32 to vector<12x128xf32>
    %48 = arith.addf %46, %47 : vector<12x128xf32>
    %49 = math.rsqrt %48 : vector<12x128xf32>
    %50 = arith.mulf %40, %49 : vector<12x128xf32>
    %51 = arith.mulf %43, %49 : vector<12x128xf32>
    %52 = tpu.concatenate %50, %51 in 1 : vector<12x128xf32>, vector<12x128xf32> -> vector<12x256xf32>
    %53 = arith.truncf %52 : vector<12x256xf32> to vector<12x256xbf16>
    %c0_7 = arith.constant 0 : index
    %c0_8 = arith.constant 0 : index
    %c0_9 = arith.constant 0 : index
    %54 = vector.load %arg5[%c0_7, %c0_8, %c0_9] : memref<1x12x256xf32, #tpu.memory_space<vmem>>, vector<1x12x256xf32>
    %55 = vector.shape_cast %54 : vector<1x12x256xf32> to vector<12x256xf32>
    %c0_10 = arith.constant 0 : index
    %c0_11 = arith.constant 0 : index
    %c0_12 = arith.constant 0 : index
    %56 = vector.load %arg4[%c0_10, %c0_11, %c0_12] : memref<1x256x256xbf16, #tpu.memory_space<vmem>>, vector<1x256x256xbf16>
    %57 = vector.shape_cast %56 : vector<1x256x256xbf16> to vector<256x256xbf16>
    %cst_13 = arith.constant dense<0.000000e+00> : vector<12x256xf32>
    %58 = tpu.matmul %53, %57, %cst_13 {dimension_numbers = #tpu.dot_dimension_numbers<[1], [0], [0], [1], [0, 0, 1, 1], [], []>} : vector<12x256xbf16>, vector<256x256xbf16>, vector<12x256xf32> -> vector<12x256xf32>
    %59 = arith.addf %55, %58 : vector<12x256xf32>
    %c0_14 = arith.constant 0 : index
    %c0_15 = arith.constant 0 : index
    %c0_16 = arith.constant 0 : index
    %60 = vector.load %arg5[%c0_14, %c0_15, %c0_16] : memref<1x12x256xf32, #tpu.memory_space<vmem>>, vector<1x12x256xf32>
    %61 = vector.shape_cast %60 : vector<1x12x256xf32> to vector<12x256xf32>
    %62 = vector.shape_cast %59 : vector<12x256xf32> to vector<1x12x256xf32>
    tpu.vector_store %arg5[%c0_14, %c0_15, %c0_16], %62 {strides = array<i32>} : memref<1x12x256xf32, #tpu.memory_space<vmem>>, vector<1x12x256xf32>,
    return
  }
  func.func @transform_0(%arg0: i32, %arg1: i32) -> (i32, i32, i32) {
    %c0_i32 = arith.constant 0 : i32
    %c0_i32_0 = arith.constant 0 : i32
    %c0_i32_1 = arith.constant 0 : i32
    return %arg0, %c0_i32, %c0_i32_0 : i32, i32, i32
  }
  func.func @transform_1(%arg0: i32, %arg1: i32) -> (i32, i32, i32) {
    %c0_i32 = arith.constant 0 : i32
    %c0_i32_0 = arith.constant 0 : i32
    %c0_i32_1 = arith.constant 0 : i32
    return %arg1, %c0_i32, %c0_i32_0 : i32, i32, i32
  }
  func.func @transform_2(%arg0: i32, %arg1: i32) -> (i32, i32, i32) {
    %c0_i32 = arith.constant 0 : i32
    %c0_i32_0 = arith.constant 0 : i32
    %c0_i32_1 = arith.constant 0 : i32
    return %arg1, %c0_i32, %c0_i32_0 : i32, i32, i32
  }
  func.func @transform_3(%arg0: i32, %arg1: i32) -> (i32, i32, i32) {
    %c0_i32 = arith.constant 0 : i32
    %c0_i32_0 = arith.constant 0 : i32
    %c0_i32_1 = arith.constant 0 : i32
    return %arg0, %c0_i32, %c0_i32_0 : i32, i32, i32
  }
}

</mosaic_0001>

<llo_original>
// kernel: tpu_custom_call.1
$region0: #{tpu_custom_call.1}
  #allocation0 [shape = 'u32[]', space=smem, size = 0x4, offset = 0x4, fixed_abs, tag = 'smem constant byte address 0x4 - core index']
  #allocation1 [shape = 'u32[144,128]{1,0:T(1,128)}', space=vmem, size = 0x12000, scoped, tag = 'internal scratch']
  %s0 = inlined_call_operand.hbm [shape: bf16[1,8,128], index: 0, kind: input, shape index: {}]
  %s1 = inlined_call_operand.hbm [shape: bf16[2,128,256], index: 1, kind: input, shape index: {}]
  %s2 = inlined_call_operand.hbm [shape: bf16[2,256,256], index: 2, kind: input, shape index: {}]
  %s3 = inlined_call_operand.vmem [shape: f32[1,12,256], index: 3, kind: output, shape index: {}]
  %s4 = sld [smem:[#allocation0]]
  $region61: #{tpu_custom_call.1} parent=0
    _
  %s6 = ssub.s32 1, %s4
  %s7 = scalar_select 0, %s6, %s4
  $region1: #{tpu_custom_call.1} parent=0
    #allocation2 [shape = 'u8[2048]{0}', space=vmem, size = 0x800, scoped, tag = 'input window, operand 0, single buffered']
    #allocation3 [shape = 's32[2]{0}', space=sflag, size = 0x8, scoped, tag = 'scoped memory for tpu_custom_call.1']
    #allocation4 [shape = 'u8[131072]{0}', space=vmem, size = 0x20000, scoped, tag = 'input window, operand 1']
    #allocation5 [shape = 's32[2]{0}', space=sflag, size = 0x8, scoped, tag = 'scoped memory for tpu_custom_call.1']
    #allocation6 [shape = 'u8[262144]{0}', space=vmem, size = 0x40000, scoped, tag = 'input window, operand 2']
    %8 = vsyncpa [#allocation3], 0
    %9 = vsyncpa [#allocation5], 0
    %s10 = scalar_lea.sflag [#allocation5], 1
    %11 = vsyncpa %s10, 0
    loop: start=0, step=1, limit=4
    $region2: #{tpu_custom_call.1} parent=1 // loop_pre_header
      _
    $region3: #{tpu_custom_call.1} parent=1 // loop_header
      %s13 = sphi 0, %s17
      %p14 = scmp.ge.s32.totalorder %s13, 4
      %s20 = sphi 0, %s32
      %s21 = sphi 0, %s28
      %s22 = sphi 0, %s20
      %s23 = sphi 0, %s21
      %s24 = sphi 0, %s22
      %s25 = sphi 0, %s23
      %s35 = sphi 0, %s37
      %s38 = sphi 0, %s35
      %s39 = sphi 0, %s38
      %s55 = sphi 0, %s39
      %s61 = sphi 0, %s63
      %s64 = sphi 0, %s61
      %s65 = sphi 0, %s64
      %s81 = sphi 0, %s65
      %s87 = sphi 0, %s89
      %s90 = sphi 0, %s87
      %s91 = sphi 0, %s90
      %s107 = sphi 0, %s91
      %s113 = sphi 0, %s115
      %s116 = sphi 0, %s113
      %s117 = sphi 0, %s116
      %s133 = sphi 0, %s117
    $region4: #{tpu_custom_call.1} parent=1 // loop_header_branch
      %16 = sbr.rel (%p14) target = $region8
    $region5: #{tpu_custom_call.1} parent=1 // loop_body
      %s18 = ssub.s32 %s13, 1
      %s19 = ssub.s32 %s13, 2
      %s26 = sadd.s32 1, %s21
      %p27 = scmp.ge.s32.totalorder %s26, 2
      %s28 = scalar_select %p27, 0, %s26
      %s29 = sadd.s32 1, %s20
      %s30 = scalar_select %p27, %s29, %s20
      %p31 = scmp.ge.s32.totalorder %s30, 1
      %s32 = scalar_select %p31, 0, %s30
      %s33 = ssub.s32 %s20, %s32
      %p34 = scmp.eq.s32.totalorder %s33, 0
      %s36 = sadd.s32 %s35, 1
      %s37 = scalar_select %p34, %s35, %s36
      %p40 = pneg %p34
      %p41 = scmp.eq.s32.totalorder %s13, 1
      %p42 = por %p40, %p41
      %p43 = scmp.ne.s32.totalorder %s35, %s38
      %p44 = scmp.eq.s32.totalorder %s13, 0
      %p45 = por %p43, %p44
      %p46 = scmp.ne.s32.totalorder %s35, %s38
      %p47 = scmp.eq.s32.totalorder %s18, 1
      %p48 = por %p46, %p47
      %p49 = scmp.ne.s32.totalorder %s38, %s39
      %p50 = scmp.eq.s32.totalorder %s18, 0
      %p51 = por %p49, %p50
      %p52 = scmp.ne.s32.totalorder %s38, %s39
      %p53 = scmp.eq.s32.totalorder %s19, 1
      %p54 = por %p52, %p53
      %p56 = scmp.ne.s32.totalorder %s39, %s55
      %p57 = scmp.eq.s32.totalorder %s19, 0
      %p58 = por %p56, %p57
      %s59 = ssub.s32 %s21, %s28
      %p60 = scmp.eq.s32.totalorder %s59, 0
      %s62 = sadd.s32 %s61, 1
      %s63 = scalar_select %p60, %s61, %s62
      %p66 = pneg %p60
      %p67 = scmp.eq.s32.totalorder %s13, 1
      %p68 = por %p66, %p67
      %p69 = scmp.ne.s32.totalorder %s61, %s64
      %p70 = scmp.eq.s32.totalorder %s13, 0
      %p71 = por %p69, %p70
      %p72 = scmp.ne.s32.totalorder %s61, %s64
      %p73 = scmp.eq.s32.totalorder %s18, 1
      %p74 = por %p72, %p73
      %p75 = scmp.ne.s32.totalorder %s64, %s65
      %p76 = scmp.eq.s32.totalorder %s18, 0
      %p77 = por %p75, %p76
      %p78 = scmp.ne.s32.totalorder %s64, %s65
      %p79 = scmp.eq.s32.totalorder %s19, 1
      %p80 = por %p78, %p79
      %p82 = scmp.ne.s32.totalorder %s65, %s81
      %p83 = scmp.eq.s32.totalorder %s19, 0
      %p84 = por %p82, %p83
      %s85 = ssub.s32 %s21, %s28
      %p86 = scmp.eq.s32.totalorder %s85, 0
      %s88 = sadd.s32 %s87, 1
      %s89 = scalar_select %p86, %s87, %s88
      %p92 = pneg %p86
      %p93 = scmp.eq.s32.totalorder %s13, 1
      %p94 = por %p92, %p93
      %p95 = scmp.ne.s32.totalorder %s87, %s90
      %p96 = scmp.eq.s32.totalorder %s13, 0
      %p97 = por %p95, %p96
      %p98 = scmp.ne.s32.totalorder %s87, %s90
      %p99 = scmp.eq.s32.totalorder %s18, 1
      %p100 = por %p98, %p99
      %p101 = scmp.ne.s32.totalorder %s90, %s91
      %p102 = scmp.eq.s32.totalorder %s18, 0
      %p103 = por %p101, %p102
      %p104 = scmp.ne.s32.totalorder %s90, %s91
      %p105 = scmp.eq.s32.totalorder %s19, 1
      %p106 = por %p104, %p105
      %p108 = scmp.ne.s32.totalorder %s91, %s107
      %p109 = scmp.eq.s32.totalorder %s19, 0
      %p110 = por %p108, %p109
      %s111 = ssub.s32 %s20, %s32
      %p112 = scmp.eq.s32.totalorder %s111, 0
      %s114 = sadd.s32 %s113, 1
      %s115 = scalar_select %p112, %s113, %s114
      %p118 = pneg %p112
      %p119 = scmp.eq.s32.totalorder %s13, 1
      %p120 = por %p118, %p119
      %p121 = scmp.ne.s32.totalorder %s113, %s116
      %p122 = scmp.eq.s32.totalorder %s13, 0
      %p123 = por %p121, %p122
      %p124 = scmp.ne.s32.totalorder %s113, %s116
      %p125 = scmp.eq.s32.totalorder %s18, 1
      %p126 = por %p124, %p125
      %p127 = scmp.ne.s32.totalorder %s116, %s117
      %p128 = scmp.eq.s32.totalorder %s18, 0
      %p129 = por %p127, %p128
      %p130 = scmp.ne.s32.totalorder %s116, %s117
      %p131 = scmp.eq.s32.totalorder %s19, 1
      %p132 = por %p130, %p131
      %p134 = scmp.ne.s32.totalorder %s117, %s133
      %p135 = scmp.eq.s32.totalorder %s19, 0
      %p136 = por %p134, %p135
      %p137 = scmp.le.s32.totalorder 1, %s13
      %p138 = scmp.lt.s32.totalorder %s13, 3
      %p139 = pnand %p137, %p138
      %p140 = pneg %p139
      // Predicated region
      $region9: #{tpu_custom_call.1} parent=5 // pred_check
        _
      $region10: #{tpu_custom_call.1} parent=5 // pred_check_branch
        %142 = sbr.rel (%p139) target = $region12
      $region11: #{tpu_custom_call.1} parent=5 // pred_region
        %s143 = ssub.s32 %s13, 1
        // Predicated region
        $region13: #{tpu_custom_call.1} parent=11 // pred_check
          %p144 = pneg %p51
        $region14: #{tpu_custom_call.1} parent=11 // pred_check_branch
          %146 = sbr.rel (%p144) target = $region16
        $region15: #{tpu_custom_call.1} parent=11 // pred_region
          %s148 = ssub.s32 64, 64
          %149 = vsyncadd [#allocation3], %s148
          %s150 = smul.addr %s22, 64
          %s151 = scalar_lea.hbm %s0, %s150
          %s153 = sshll.u32 [#allocation2], 4
          %s154 = int_to_ptr.vmem [resolvable:$true] %s153
          %156 = dma.hbm_to_vmem [thread:$0]  %s151, 64, %s154, [#allocation3]
        $region16: #{tpu_custom_call.1} parent=11 // pred_fallthru
          _
      $region12: #{tpu_custom_call.1} parent=5 // pred_fallthru
        _
      %p157 = scmp.lt.s32.totalorder %s13, 2
      // Predicated region
      $region17: #{tpu_custom_call.1} parent=5 // pred_check
        %p158 = pneg %p157
      $region18: #{tpu_custom_call.1} parent=5 // pred_check_branch
        %160 = sbr.rel (%p158) target = $region20
      $region19: #{tpu_custom_call.1} parent=5 // pred_region
        // Predicated region
        $region21: #{tpu_custom_call.1} parent=19 // pred_check
          %p161 = pneg %p71
        $region22: #{tpu_custom_call.1} parent=19 // pred_check_branch
          %163 = sbr.rel (%p161) target = $region24
        $region23: #{tpu_custom_call.1} parent=19 // pred_region
          %s164 = sand.u32 %s13, 1
          %s165 = scalar_lea.sflag [#allocation5], %s164
          %s166 = sand.u32 %s61, 1
          %s167 = smul.addr %s166, 128
          %s168 = scalar_lea.vmem [#allocation4], %s167
          %s170 = ssub.s32 2048, 2048
          %171 = vsyncadd %s165, %s170
          %s172 = smul.addr %s21, 32
          %s173 = smul.addr %s172, 64
          %s174 = scalar_lea.hbm %s1, %s173
          %s175 = sshll.u32 %s168, 4
          %s176 = int_to_ptr.vmem [resolvable:$true] %s175
          %181 = dma.hbm_to_vmem [thread:$0]  %s174, 2048, %s176, %s165, 128, 128, 8
        $region24: #{tpu_custom_call.1} parent=19 // pred_fallthru
          _
        // Predicated region
        $region25: #{tpu_custom_call.1} parent=19 // pred_check
          %p182 = pneg %p97
        $region26: #{tpu_custom_call.1} parent=19 // pred_check_branch
          %184 = sbr.rel (%p182) target = $region28
        $region27: #{tpu_custom_call.1} parent=19 // pred_region
          %s185 = sand.u32 %s13, 1
          %s186 = scalar_lea.sflag [#allocation5], %s185
          %s187 = sand.u32 %s87, 1
          %s188 = smul.addr %s187, 256
          %s189 = scalar_lea.vmem [#allocation6], %s188
          %s191 = ssub.s32 4096, 4096
          %192 = vsyncadd %s186, %s191
          %s193 = smul.addr %s21, 64
          %s194 = smul.addr %s193, 64
          %s195 = scalar_lea.hbm %s2, %s194
          %s196 = sshll.u32 %s189, 4
          %s197 = int_to_ptr.vmem [resolvable:$true] %s196
          %202 = dma.hbm_to_vmem [thread:$0]  %s195, 4096, %s197, %s186, 128, 128, 8
        $region28: #{tpu_custom_call.1} parent=19 // pred_fallthru
          _
      $region20: #{tpu_custom_call.1} parent=5 // pred_fallthru
        _
      %p203 = scmp.le.s32.totalorder 1, %s13
      %p204 = scmp.lt.s32.totalorder %s13, 3
      %p205 = pnand %p203, %p204
      %p206 = pneg %p205
      // Predicated region
      $region29: #{tpu_custom_call.1} parent=5 // pred_check
        _
      $region30: #{tpu_custom_call.1} parent=5 // pred_check_branch
        %208 = sbr.rel (%p205) target = $region32
      $region31: #{tpu_custom_call.1} parent=5 // pred_region
        %s209 = ssub.s32 %s13, 1
        // Predicated region
        $region33: #{tpu_custom_call.1} parent=31 // pred_check
          %p210 = pneg %p51
        $region34: #{tpu_custom_call.1} parent=31 // pred_check_branch
          %212 = sbr.rel (%p210) target = $region36
        $region35: #{tpu_custom_call.1} parent=31 // pred_region
          %213 = dma.done [#allocation3], 64
        $region36: #{tpu_custom_call.1} parent=31 // pred_fallthru
          _
        %s214 = sand.u32 %s18, 1
        %s215 = scalar_lea.sflag [#allocation5], %s214
        %s216 = sand.u32 %s64, 1
        %s217 = smul.addr %s216, 128
        %s218 = scalar_lea.vmem [#allocation4], %s217
        // Predicated region
        $region37: #{tpu_custom_call.1} parent=31 // pred_check
          %p219 = pneg %p77
        $region38: #{tpu_custom_call.1} parent=31 // pred_check_branch
          %221 = sbr.rel (%p219) target = $region40
        $region39: #{tpu_custom_call.1} parent=31 // pred_region
          %222 = dma.done %s215, 2048
        $region40: #{tpu_custom_call.1} parent=31 // pred_fallthru
          _
        %s223 = sand.u32 %s18, 1
        %s224 = scalar_lea.sflag [#allocation5], %s223
        %s225 = sand.u32 %s90, 1
        %s226 = smul.addr %s225, 256
        %s227 = scalar_lea.vmem [#allocation6], %s226
        // Predicated region
        $region41: #{tpu_custom_call.1} parent=31 // pred_check
          %p228 = pneg %p103
        $region42: #{tpu_custom_call.1} parent=31 // pred_check_branch
          %230 = sbr.rel (%p228) target = $region44
        $region43: #{tpu_custom_call.1} parent=31 // pred_region
          %231 = dma.done %s224, 4096
        $region44: #{tpu_custom_call.1} parent=31 // pred_fallthru
          _
        %p232 = pneg %p51
        %p233 = pneg %p48
        %s234 = sand.u32 %s18, 1
        %s235 = scalar_lea.sflag [#allocation5], %s234
        %s236 = sand.u32 %s64, 1
        %s237 = smul.addr %s236, 128
        %s238 = scalar_lea.vmem [#allocation4], %s237
        %p239 = pneg %p77
        %p240 = pneg %p74
        %s241 = sand.u32 %s18, 1
        %s242 = scalar_lea.sflag [#allocation5], %s241
        %s243 = sand.u32 %s90, 1
        %s244 = smul.addr %s243, 256
        %s245 = scalar_lea.vmem [#allocation6], %s244
        %p246 = pneg %p103
        %p247 = pneg %p100
        %p248 = pneg %p129
        %p249 = pneg %p126
        %p250 = scmp.lt.s32.totalorder %s22, 0
        %s251 = scalar_select %p250, %s22, 0
        %s252 = smul.addr %s251, 4
        %s253 = smul.addr %s252, 8
        %s254 = scalar_lea.vmem %s3, %s253
        %p255 = scmp.lt.s32.totalorder %s22, 0
        %s256 = scalar_select %p255, %s22, 0
        %s257 = smul.addr %s256, 4
        %s258 = smul.addr %s257, 8
        %s259 = scalar_lea.vmem %s3, %s258
        %p261 = scmp.eq.s32.totalorder %s23, 0
        // Predicated region
        $region45: #{tpu_custom_call.1} parent=31 // pred_check
          %p262 = pneg %p261
        $region46: #{tpu_custom_call.1} parent=31 // pred_check_branch
          %264 = sbr.rel (%p262) target = $region48
        $region47: #{tpu_custom_call.1} parent=31 // pred_region
          %265 = vst [vmem:[%s259] sm:$0xff] 0.0
          %266 = vst [vmem:[%s259 + $0x8] sm:$0xff] 0.0
          %267 = vst [vmem:[%s259 + $0x10] sm:$0xf] 0.0
          %268 = vst [vmem:[%s259 + $0x18] sm:$0xf] 0.0
        $region48: #{tpu_custom_call.1} parent=31 // pred_fallthru
          _
        %v269 = vld [vmem:[#allocation2] sm:$0xf]
        %v270 = vld [vmem:[%s218] sm:$0xff]
        %v271 = vld [vmem:[%s218 + $0x8] sm:$0xff]
        %v272 = vld [vmem:[%s218 + $0x10] sm:$0xff]
        %v273 = vld [vmem:[%s218 + $0x18] sm:$0xff]
        %v274 = vld [vmem:[%s218 + $0x20] sm:$0xff]
        %v275 = vld [vmem:[%s218 + $0x28] sm:$0xff]
        %v276 = vld [vmem:[%s218 + $0x30] sm:$0xff]
        %v277 = vld [vmem:[%s218 + $0x38] sm:$0xff]
        %v278 = vld [vmem:[%s218 + $0x40] sm:$0xff]
        %v279 = vld [vmem:[%s218 + $0x48] sm:$0xff]
        %v280 = vld [vmem:[%s218 + $0x50] sm:$0xff]
        %v281 = vld [vmem:[%s218 + $0x58] sm:$0xff]
        %v282 = vld [vmem:[%s218 + $0x60] sm:$0xff]
        %v283 = vld [vmem:[%s218 + $0x68] sm:$0xff]
        %v284 = vld [vmem:[%s218 + $0x70] sm:$0xff]
        %v285 = vld [vmem:[%s218 + $0x78] sm:$0xff]
        %v302 = vunpack.c.l.b16 %v270
        %v303 = vunpack.c.h.b16 %v270
        %v304 = vunpack.c.l.b16 %v271
        %v305 = vunpack.c.h.b16 %v271
        %v306 = vunpack.c.l.b16 %v272
        %v307 = vunpack.c.h.b16 %v272
        %v308 = vunpack.c.l.b16 %v273
        %v309 = vunpack.c.h.b16 %v273
        %v310 = vunpack.c.l.b16 %v274
        %v311 = vunpack.c.h.b16 %v274
        %v312 = vunpack.c.l.b16 %v275
        %v313 = vunpack.c.h.b16 %v275
        %v314 = vunpack.c.l.b16 %v276
        %v315 = vunpack.c.h.b16 %v276
        %v316 = vunpack.c.l.b16 %v277
        %v317 = vunpack.c.h.b16 %v277
        %v318 = vunpack.c.l.b16 %v278
        %v319 = vunpack.c.h.b16 %v278
        %v320 = vunpack.c.l.b16 %v279
        %v321 = vunpack.c.h.b16 %v279
        %v322 = vunpack.c.l.b16 %v280
        %v323 = vunpack.c.h.b16 %v280
        %v324 = vunpack.c.l.b16 %v281
        %v325 = vunpack.c.h.b16 %v281
        %v326 = vunpack.c.l.b16 %v282
        %v327 = vunpack.c.h.b16 %v282
        %v328 = vunpack.c.l.b16 %v283
        %v329 = vunpack.c.h.b16 %v283
        %v330 = vunpack.c.l.b16 %v284
        %v331 = vunpack.c.h.b16 %v284
        %v332 = vunpack.c.l.b16 %v285
        %v333 = vunpack.c.h.b16 %v285
        %v334 = vpack.c.b16 %v304, %v302
        %v335 = vpack.c.b16 %v305, %v303
        %v336 = vpack.c.b16 %v308, %v306
        %v337 = vpack.c.b16 %v309, %v307
        %v338 = vpack.c.b16 %v312, %v310
        %v339 = vpack.c.b16 %v313, %v311
        %v340 = vpack.c.b16 %v316, %v314
        %v341 = vpack.c.b16 %v317, %v315
        %v342 = vpack.c.b16 %v320, %v318
        %v343 = vpack.c.b16 %v321, %v319
        %v344 = vpack.c.b16 %v324, %v322
        %v345 = vpack.c.b16 %v325, %v323
        %v346 = vpack.c.b16 %v328, %v326
        %v347 = vpack.c.b16 %v329, %v327
        %v348 = vpack.c.b16 %v332, %v330
        %v349 = vpack.c.b16 %v333, %v331
        %366 = vmatprep.subr.bf16.mxu0 %v349
        %367 = vmatpush1.bf16.msra.mxu0 %v348
        %368 = vmatprep.subr.bf16.mxu0 %v347
        %369 = vmatpush1.bf16.msra.mxu0 %v346
        %370 = vmatprep.subr.bf16.mxu0 %v345
        %371 = vmatpush1.bf16.msra.mxu0 %v344
        %372 = vmatprep.subr.bf16.mxu0 %v343
        %373 = vmatpush1.bf16.msra.mxu0 %v342
        %374 = vmatprep.subr.bf16.mxu0 %v341
        %375 = vmatpush1.bf16.msra.mxu0 %v340
        %376 = vmatprep.subr.bf16.mxu0 %v339
        %377 = vmatpush1.bf16.msra.mxu0 %v338
        %378 = vmatprep.subr.bf16.mxu0 %v337
        %379 = vmatpush1.bf16.msra.mxu0 %v336
        %380 = vmatprep.subr.bf16.mxu0 %v335
        %381 = vmatpush1.bf16.msra.mxu0 %v334
        %382 = vmatprep.subr.bf16.mxu0 0
        %383 = vmatpush2.bf16.msra.mxu0 0
        %384 = vmatprep.subr.bf16.mxu0 0
        %385 = vmatpush2.bf16.msra.mxu0 0
        %386 = vmatprep.subr.bf16.mxu0 0
        %387 = vmatpush2.bf16.msra.mxu0 0
        %388 = vmatprep.subr.bf16.mxu0 0
        %389 = vmatpush2.bf16.msra.mxu0 0
        %390 = vmatprep.subr.bf16.mxu0 0
        %391 = vmatpush2.bf16.msra.mxu0 0
        %392 = vmatprep.subr.bf16.mxu0 0
        %393 = vmatpush2.bf16.msra.mxu0 0
        %394 = vmatprep.subr.bf16.mxu0 0
        %395 = vmatpush2.bf16.msra.mxu0 0
        %396 = vmatprep.subr.bf16.mxu0 0
        %397 = vmatpush2.bf16.msra.mxu0 0
        %398 = vmatprep.mubr.bf16.mxu0 0
        %399 = vmatmul.mubr.bf16.gmra.mxu0 %v269
        %v400 = vpop.f32.mrf.mxu0
        %v401 = vadd.f32 0.0, %v400
        %v402 = vpop.f32.mrf.mxu0
        %v403 = vadd.f32 0.0, %v402
        %v404 = vpop.f32.mrf.mxu0
        %v405 = vpop.f32.mrf.mxu0
        %406 = vdwg.mxu0
        %v408 = vrot.slane %v401, 6
        %v410 = vrot.slane %v401, 4
        %v412 = vrot.slane %v401, 2
        %vm414 = vcmask 1041408
        %v415 = vsel %vm414, %v401, %v408
        %vm416 = vcmask 1043456
        %v417 = vsel %vm416, %v415, %v410
        %vm418 = vcmask 1045504
        %v419 = vsel %vm418, %v417, %v410
        %v421 = vrot.slane %v403, 6
        %v423 = vrot.slane %v403, 4
        %v425 = vrot.slane %v403, 2
        %v427 = vsel %vm414, %v403, %v421
        %v428 = vsel %vm416, %v427, %v423
        %v429 = vsel %vm418, %v428, %v423
        %v430 = vsel %vm416, %v412, %v412
        %v431 = vsel %vm418, %v430, %v408
        %v432 = vsel %vm414, %v408, %v410
        %v433 = vsel %vm416, %v425, %v425
        %v434 = vsel %vm418, %v433, %v421
        %v435 = vsel %vm414, %v421, %v423
        %v436 = vmul.f32 %v419, %v431
        %v437 = vmul.f32 %v412, %v432
        %v438 = vmul.f32 %v429, %v434
        %v439 = vmul.f32 %v425, %v435
        %v440 = vadd.f32 %v436, %v438
        %v441 = vadd.f32 %v437, %v439
        %v442 = vmul.f32 %v429, %v431
        %v443 = vmul.f32 %v425, %v432
        %v444 = vmul.f32 %v419, %v434
        %v445 = vmul.f32 %v412, %v435
        %v446 = vsub.f32 %v442, %v444
        %v447 = vsub.f32 %v443, %v445
        %v448 = vmul.f32 %v440, %v440
        %v449 = vmul.f32 %v441, %v441
        %v450 = vmul.f32 %v446, %v446
        %v451 = vmul.f32 %v447, %v447
        %v452 = vadd.f32 %v448, %v450
        %v453 = vadd.f32 %v449, %v451
        %v454 = vadd.f32 %v452, 1e-16
        %v455 = vadd.f32 %v453, 1e-16
        %v456 = vrsqrt.pop %v454
        %v457 = vrsqrt.pop %v455
        %v458 = vmul.f32 %v440, %v456
        %v459 = vmul.f32 %v441, %v457
        %v460 = vmul.f32 %v446, %v456
        %v461 = vmul.f32 %v447, %v457
        %v462 = vpack.c.bf16 %v459, %v458
        %v463 = vpack.c.bf16 %v461, %v460
        %v464 = vld [vmem:[%s259] sm:$0xff]
        %v465 = vld [vmem:[%s259 + $0x8] sm:$0xff]
        %v466 = vld [vmem:[%s259 + $0x10] sm:$0xf]
        %v467 = vld [vmem:[%s259 + $0x18] sm:$0xf]
        %v468 = vld [vmem:[%s227] sm:$0xff]
        %v469 = vld [vmem:[%s227 + $0x8] sm:$0xff]
        %v470 = vld [vmem:[%s227 + $0x10] sm:$0xff]
        %v471 = vld [vmem:[%s227 + $0x18] sm:$0xff]
        %v472 = vld [vmem:[%s227 + $0x20] sm:$0xff]
        %v473 = vld [vmem:[%s227 + $0x28] sm:$0xff]
        %v474 = vld [vmem:[%s227 + $0x30] sm:$0xff]
        %v475 = vld [vmem:[%s227 + $0x38] sm:$0xff]
        %v476 = vld [vmem:[%s227 + $0x40] sm:$0xff]
        %v477 = vld [vmem:[%s227 + $0x48] sm:$0xff]
        %v478 = vld [vmem:[%s227 + $0x50] sm:$0xff]
        %v479 = vld [vmem:[%s227 + $0x58] sm:$0xff]
        %v480 = vld [vmem:[%s227 + $0x60] sm:$0xff]
        %v481 = vld [vmem:[%s227 + $0x68] sm:$0xff]
        %v482 = vld [vmem:[%s227 + $0x70] sm:$0xff]
        %v483 = vld [vmem:[%s227 + $0x78] sm:$0xff]
        %v484 = vld [vmem:[%s227 + $0x80] sm:$0xff]
        %v485 = vld [vmem:[%s227 + $0x88] sm:$0xff]
        %v486 = vld [vmem:[%s227 + $0x90] sm:$0xff]
        %v487 = vld [vmem:[%s227 + $0x98] sm:$0xff]
        %v488 = vld [vmem:[%s227 + $0xa0] sm:$0xff]
        %v489 = vld [vmem:[%s227 + $0xa8] sm:$0xff]
        %v490 = vld [vmem:[%s227 + $0xb0] sm:$0xff]
        %v491 = vld [vmem:[%s227 + $0xb8] sm:$0xff]
        %v492 = vld [vmem:[%s227 + $0xc0] sm:$0xff]
        %v493 = vld [vmem:[%s227 + $0xc8] sm:$0xff]
        %v494 = vld [vmem:[%s227 + $0xd0] sm:$0xff]
        %v495 = vld [vmem:[%s227 + $0xd8] sm:$0xff]
        %v496 = vld [vmem:[%s227 + $0xe0] sm:$0xff]
        %v497 = vld [vmem:[%s227 + $0xe8] sm:$0xff]
        %v498 = vld [vmem:[%s227 + $0xf0] sm:$0xff]
        %v499 = vld [vmem:[%s227 + $0xf8] sm:$0xff]
        %v532 = vunpack.c.l.b16 %v468
        %v533 = vunpack.c.h.b16 %v468
        %v534 = vunpack.c.l.b16 %v469
        %v535 = vunpack.c.h.b16 %v469
        %v536 = vunpack.c.l.b16 %v470
        %v537 = vunpack.c.h.b16 %v470
        %v538 = vunpack.c.l.b16 %v471
        %v539 = vunpack.c.h.b16 %v471
        %v540 = vunpack.c.l.b16 %v472
        %v541 = vunpack.c.h.b16 %v472
        %v542 = vunpack.c.l.b16 %v473
        %v543 = vunpack.c.h.b16 %v473
        %v544 = vunpack.c.l.b16 %v474
        %v545 = vunpack.c.h.b16 %v474
        %v546 = vunpack.c.l.b16 %v475
        %v547 = vunpack.c.h.b16 %v475
        %v548 = vunpack.c.l.b16 %v476
        %v549 = vunpack.c.h.b16 %v476
        %v550 = vunpack.c.l.b16 %v477
        %v551 = vunpack.c.h.b16 %v477
        %v552 = vunpack.c.l.b16 %v478
        %v553 = vunpack.c.h.b16 %v478
        %v554 = vunpack.c.l.b16 %v479
        %v555 = vunpack.c.h.b16 %v479
        %v556 = vunpack.c.l.b16 %v480
        %v557 = vunpack.c.h.b16 %v480
        %v558 = vunpack.c.l.b16 %v481
        %v559 = vunpack.c.h.b16 %v481
        %v560 = vunpack.c.l.b16 %v482
        %v561 = vunpack.c.h.b16 %v482
        %v562 = vunpack.c.l.b16 %v483
        %v563 = vunpack.c.h.b16 %v483
        %v564 = vunpack.c.l.b16 %v484
        %v565 = vunpack.c.h.b16 %v484
        %v566 = vunpack.c.l.b16 %v485
        %v567 = vunpack.c.h.b16 %v485
        %v568 = vunpack.c.l.b16 %v486
        %v569 = vunpack.c.h.b16 %v486
        %v570 = vunpack.c.l.b16 %v487
        %v571 = vunpack.c.h.b16 %v487
        %v572 = vunpack.c.l.b16 %v488
        %v573 = vunpack.c.h.b16 %v488
        %v574 = vunpack.c.l.b16 %v489
        %v575 = vunpack.c.h.b16 %v489
        %v576 = vunpack.c.l.b16 %v490
        %v577 = vunpack.c.h.b16 %v490
        %v578 = vunpack.c.l.b16 %v491
        %v579 = vunpack.c.h.b16 %v491
        %v580 = vunpack.c.l.b16 %v492
        %v581 = vunpack.c.h.b16 %v492
        %v582 = vunpack.c.l.b16 %v493
        %v583 = vunpack.c.h.b16 %v493
        %v584 = vunpack.c.l.b16 %v494
        %v585 = vunpack.c.h.b16 %v494
        %v586 = vunpack.c.l.b16 %v495
        %v587 = vunpack.c.h.b16 %v495
        %v588 = vunpack.c.l.b16 %v496
        %v589 = vunpack.c.h.b16 %v496
        %v590 = vunpack.c.l.b16 %v497
        %v591 = vunpack.c.h.b16 %v497
        %v592 = vunpack.c.l.b16 %v498
        %v593 = vunpack.c.h.b16 %v498
        %v594 = vunpack.c.l.b16 %v499
        %v595 = vunpack.c.h.b16 %v499
        %v596 = vpack.c.b16 %v534, %v532
        %v597 = vpack.c.b16 %v535, %v533
        %v598 = vpack.c.b16 %v538, %v536
        %v599 = vpack.c.b16 %v539, %v537
        %v600 = vpack.c.b16 %v542, %v540
        %v601 = vpack.c.b16 %v543, %v541
        %v602 = vpack.c.b16 %v546, %v544
        %v603 = vpack.c.b16 %v547, %v545
        %v604 = vpack.c.b16 %v550, %v548
        %v605 = vpack.c.b16 %v551, %v549
        %v606 = vpack.c.b16 %v554, %v552
        %v607 = vpack.c.b16 %v555, %v553
        %v608 = vpack.c.b16 %v558, %v556
        %v609 = vpack.c.b16 %v559, %v557
        %v610 = vpack.c.b16 %v562, %v560
        %v611 = vpack.c.b16 %v563, %v561
        %v612 = vpack.c.b16 %v566, %v564
        %v613 = vpack.c.b16 %v567, %v565
        %v614 = vpack.c.b16 %v570, %v568
        %v615 = vpack.c.b16 %v571, %v569
        %v616 = vpack.c.b16 %v574, %v572
        %v617 = vpack.c.b16 %v575, %v573
        %v618 = vpack.c.b16 %v578, %v576
        %v619 = vpack.c.b16 %v579, %v577
        %v620 = vpack.c.b16 %v582, %v580
        %v621 = vpack.c.b16 %v583, %v581
        %v622 = vpack.c.b16 %v586, %v584
        %v623 = vpack.c.b16 %v587, %v585
        %v624 = vpack.c.b16 %v590, %v588
        %v625 = vpack.c.b16 %v591, %v589
        %v626 = vpack.c.b16 %v594, %v592
        %v627 = vpack.c.b16 %v595, %v593
        %660 = vmatprep.subr.bf16.mxu0 %v611
        %661 = vmatpush1.bf16.msra.mxu0 %v610
        %662 = vmatprep.subr.bf16.mxu0 %v609
        %663 = vmatpush1.bf16.msra.mxu0 %v608
        %664 = vmatprep.subr.bf16.mxu0 %v607
        %665 = vmatpush1.bf16.msra.mxu0 %v606
        %666 = vmatprep.subr.bf16.mxu0 %v605
        %667 = vmatpush1.bf16.msra.mxu0 %v604
        %668 = vmatprep.subr.bf16.mxu0 %v603
        %669 = vmatpush1.bf16.msra.mxu0 %v602
        %670 = vmatprep.subr.bf16.mxu0 %v601
        %671 = vmatpush1.bf16.msra.mxu0 %v600
        %672 = vmatprep.subr.bf16.mxu0 %v599
        %673 = vmatpush1.bf16.msra.mxu0 %v598
        %674 = vmatprep.subr.bf16.mxu0 %v597
        %675 = vmatpush1.bf16.msra.mxu0 %v596
        %676 = vmatprep.subr.bf16.mxu0 %v627
        %677 = vmatpush2.bf16.msra.mxu0 %v626
        %678 = vmatprep.subr.bf16.mxu0 %v625
        %679 = vmatpush2.bf16.msra.mxu0 %v624
        %680 = vmatprep.subr.bf16.mxu0 %v623
        %681 = vmatpush2.bf16.msra.mxu0 %v622
        %682 = vmatprep.subr.bf16.mxu0 %v621
        %683 = vmatpush2.bf16.msra.mxu0 %v620
        %684 = vmatprep.subr.bf16.mxu0 %v619
        %685 = vmatpush2.bf16.msra.mxu0 %v618
        %686 = vmatprep.subr.bf16.mxu0 %v617
        %687 = vmatpush2.bf16.msra.mxu0 %v616
        %688 = vmatprep.subr.bf16.mxu0 %v615
        %689 = vmatpush2.bf16.msra.mxu0 %v614
        %690 = vmatprep.subr.bf16.mxu0 %v613
        %691 = vmatpush2.bf16.msra.mxu0 %v612
        %692 = vmatprep.mubr.bf16.mxu0 %v463
        %693 = vmatmul.mubr.bf16.gmra.mxu0 %v462
        %v694 = vpop.f32.mrf.mxu0
        %v695 = vadd.f32 0.0, %v694
        %v696 = vpop.f32.mrf.mxu0
        %v697 = vadd.f32 0.0, %v696
        %v698 = vpop.f32.mrf.mxu0
        %v699 = vadd.f32 0.0, %v698
        %v700 = vpop.f32.mrf.mxu0
        %v701 = vadd.f32 0.0, %v700
        %702 = vdwg.mxu0
        %v703 = vadd.f32 %v464, %v695
        %v704 = vadd.f32 %v465, %v697
        %v705 = vadd.f32 %v466, %v699
        %v706 = vadd.f32 %v467, %v701
        %707 = vst [vmem:[%s259] sm:$0xff] %v703
        %708 = vst [vmem:[%s259 + $0x8] sm:$0xff] %v704
        %709 = vst [vmem:[%s259 + $0x10] sm:$0xf] %v705
        %710 = vst [vmem:[%s259 + $0x18] sm:$0xf] %v706
        %p711 = scmp.lt.s32.totalorder %s22, 0
        %s712 = scalar_select %p711, %s22, 0
        %s713 = smul.addr %s712, 4
        %s714 = smul.addr %s713, 8
        %s715 = scalar_lea.vmem %s3, %s714
        // Predicated region
        $region49: #{tpu_custom_call.1} parent=31 // pred_check
          %p716 = pneg %p126
        $region50: #{tpu_custom_call.1} parent=31 // pred_check_branch
          %718 = sbr.rel (%p716) target = $region52
        $region51: #{tpu_custom_call.1} parent=31 // pred_region
          _
        $region52: #{tpu_custom_call.1} parent=31 // pred_fallthru
          _
        // Predicated region
        $region53: #{tpu_custom_call.1} parent=31 // pred_check
          %p719 = pneg %p126
        $region54: #{tpu_custom_call.1} parent=31 // pred_check_branch
          %721 = sbr.rel (%p719) target = $region56
        $region55: #{tpu_custom_call.1} parent=31 // pred_region
          %p722 = scmp.lt.s32.totalorder %s22, 0
          %s723 = scalar_select %p722, %s22, 0
          %s724 = smul.addr %s723, 4
          %s725 = smul.addr %s724, 8
          %s726 = scalar_lea.vmem %s3, %s725
        $region56: #{tpu_custom_call.1} parent=31 // pred_fallthru
          _
      $region32: #{tpu_custom_call.1} parent=5 // pred_fallthru
        _
      %p727 = scmp.le.s32.totalorder 2, %s13
      // Predicated region
      $region57: #{tpu_custom_call.1} parent=5 // pred_check
        %p728 = pneg %p727
      $region58: #{tpu_custom_call.1} parent=5 // pred_check_branch
        %730 = sbr.rel (%p728) target = $region60
      $region59: #{tpu_custom_call.1} parent=5 // pred_region
        %s731 = ssub.s32 %s13, 2
      $region60: #{tpu_custom_call.1} parent=5 // pred_fallthru
        _
    $region6: #{tpu_custom_call.1} parent=1 // loop_footer
      %s17 = sadd.s32 1, %s13
    $region7: #{tpu_custom_call.1} parent=1 // loop_footer_branch
      %12 = sbr.rel target = $region3
    $region8: #{tpu_custom_call.1} parent=1 // loop_exit
      _
    %732 = vsyncpa [#allocation3], 1
    %s733 = scalar_lea.sflag [#allocation3], 1
    %734 = vsyncpa %s733, 1
    %735 = vsyncpa [#allocation5], 1
    %s736 = scalar_lea.sflag [#allocation5], 1
    %737 = vsyncpa %s736, 1

</llo_original>
